<compile_context>
chip_gen: v6e
topology: v6e:2x2x1
jax: 0.10.0
libtpu: 0.0.40
codegen_flags: <defaults>
</compile_context>

<pallas_src>
import numpy as np
import jax
import jax.numpy as jnp
from jax import lax
from jax.experimental import pallas as pl
from jax.experimental.pallas import tpu as pltpu


def _round_up(x, m):
    return ((x + m - 1) // m) * m


# ----------------------------------------------------------------------------
# Stage 1: complex conv, kernel (1, ksp, ksp).  Emits the zero-padded canonical
# (H+2ph, W+2pw) plane (flattened, lane-dense) incl. the T pad slabs, i.e. the
# exact input stage 2 needs — no wrapper re-pad.
# ----------------------------------------------------------------------------
def _conv_stage1(xp, w1c, mask, tap_offsets, l_int, t_len, pt):
    N, T, c2in, l_in = xp.shape
    ntaps, c2mid, _ = w1c.shape
    Tp = t_len + 2 * pt

    def kernel(x_ref, w_ref, m_ref, o_ref):
        t = pl.program_id(1)
        interior = jnp.logical_and(t >= pt, t < pt + t_len)

        @pl.when(interior)
        def _():
            acc = None
            for j, off in enumerate(tap_offsets):          # static unroll over taps
                contrib = jnp.dot(w_ref[j], x_ref[:, off:off + l_int],
                                  preferred_element_type=jnp.float32)
                acc = contrib if acc is None else acc + contrib
            # mask zeroes the spatial pad border and the flat-window wrap garbage,
            # single lane-dense store.
            o_ref[...] = acc * m_ref[...]

        @pl.when(jnp.logical_not(interior))
        def _():
            o_ref[...] = jnp.zeros_like(o_ref)             # fused T padding

    return pl.pallas_call(
        kernel,
        out_shape=jax.ShapeDtypeStruct((N, Tp, c2mid, l_int), jnp.float32),
        grid=(N, Tp),
        in_specs=[
            pl.BlockSpec((None, None, c2in, l_in),
                         lambda n, t: (n, jnp.clip(t - pt, 0, t_len - 1), 0, 0)),
            pl.BlockSpec((ntaps, c2mid, c2in), lambda n, t: (0, 0, 0)),
            pl.BlockSpec((1, l_int), lambda n, t: (0, 0)),
        ],
        out_specs=pl.BlockSpec((None, None, c2mid, l_int),
                               lambda n, t: (n, t, 0, 0)),
        compiler_params=pltpu.CompilerParams(
            dimension_semantics=("parallel", "parallel")),
    )(xp, w1c, mask)


# ----------------------------------------------------------------------------
# Stage 2 (fused): conv_xt + conv_yt + add + cPReLU.
# ----------------------------------------------------------------------------
def _shift_map(k):
    def imap(n, t):
        return (n, t + k, 0, 0)
    return imap


def _conv_stage2_fused(spp, w2c, alpha2, taps, kt, l_out, t_len):
    N, Tp, c2mid, l_int = spp.shape
    ntaps, c2out, _ = w2c.shape

    def kernel(*refs):
        x_refs = refs[:kt]          # kt T-shifted views of the padded intermediate
        w_ref = refs[kt]
        a_ref = refs[kt + 1]
        o_ref = refs[kt + 2]
        acc = None
        for j, (k_t, off) in enumerate(taps):              # static unroll over taps
            contrib = jnp.dot(w_ref[j], x_refs[k_t][:, off:off + l_out],
                              preferred_element_type=jnp.float32)
            acc = contrib if acc is None else acc + contrib
        # cPReLU fused into the single lane-dense store (no o_ref reload).
        o_ref[...] = jnp.where(acc >= 0.0, acc, a_ref[...] * acc)

    in_specs = [pl.BlockSpec((None, None, c2mid, l_int), _shift_map(k))
                for k in range(kt)]
    in_specs.append(pl.BlockSpec((ntaps, c2out, c2mid), lambda n, t: (0, 0, 0)))
    in_specs.append(pl.BlockSpec((c2out, 1), lambda n, t: (0, 0)))

    return pl.pallas_call(
        kernel,
        out_shape=jax.ShapeDtypeStruct((N, c2out, t_len * l_out), jnp.float32),
        grid=(N, t_len),
        in_specs=in_specs,
        # output laid out (N, 2Cout, T*plane): no final transpose in the wrapper.
        out_specs=pl.BlockSpec((None, c2out, l_out), lambda n, t: (n, 0, t)),
        compiler_params=pltpu.CompilerParams(
            dimension_semantics=("parallel", "parallel")),
    )(*([spp] * kt), w2c, alpha2)


# ----------------------------------------------------------------------------
# Module wrapper (parameter setup + layout plumbing)
# ----------------------------------------------------------------------------
def _complex_block(wr, wi):
    """(Cin, Cout) real/imag kernels -> (2Cout, 2Cin) so [yr; yi] = W2 @ [xr; xi]."""
    a = wr.T
    b = wi.T
    return jnp.concatenate(
        [jnp.concatenate([a, -b], axis=1),
         jnp.concatenate([b, a], axis=1)], axis=0)


class ComplexSplitFastPallas:
    def __init__(self, in_channels, inter_channels, out_channels,
                 kernel_size_sp=3, kernel_size_t=3, key=None):
        # inter_channels recomputed exactly as in the PyTorch module.
        nom = kernel_size_sp ** 2 * kernel_size_t * in_channels * out_channels
        denom = (kernel_size_sp ** 2 * in_channels
                 + 2 * kernel_size_sp * kernel_size_t * out_channels)
        inter_channels = int(np.floor(nom / denom))
        self.in_channels = in_channels
        self.inter_channels = inter_channels
        self.out_channels = out_channels
        self.ksp = kernel_size_sp
        self.kt = kernel_size_t

        if key is None:
            key = jax.random.PRNGKey(0)
        keys = jax.random.split(key, 6)

        def init_w(k, shape):
            fan_in = shape[0] * shape[1] * shape[2] * shape[3]
            scale = 1.0 / np.sqrt(2.0 * fan_in)
            return scale * jax.random.normal(k, shape, jnp.float32)

        ksp, kt = kernel_size_sp, kernel_size_t
        # raw weights (KT, KH, KW, Cin, Cout), real & imag parts (DHWIO layout).
        self.w_xy_re = init_w(keys[0], (1, ksp, ksp, in_channels, inter_channels))
        self.w_xy_im = init_w(keys[1], (1, ksp, ksp, in_channels, inter_channels))
        self.w_xt_re = init_w(keys[2], (kt, 1, ksp, inter_channels, out_channels))
        self.w_xt_im = init_w(keys[3], (kt, 1, ksp, inter_channels, out_channels))
        self.w_yt_re = init_w(keys[4], (kt, ksp, 1, inter_channels, out_channels))
        self.w_yt_im = init_w(keys[5], (kt, ksp, 1, inter_channels, out_channels))
        # cPReLU: per-out-channel alpha (init 0.25), same slope for re & im parts.
        self.alpha = jnp.full((out_channels,), 0.25, jnp.float32)

        # complex-folded block weights, one (2Co, 2Ci) block per tap.
        w1 = [_complex_block(self.w_xy_re[0, kh, kw], self.w_xy_im[0, kh, kw])
              for kh in range(ksp) for kw in range(ksp)]
        self.w1c = jnp.stack(w1)                       # (ksp*ksp, 2Cmid, 2Cin)
        self.tap1 = [(kh, kw) for kh in range(ksp) for kw in range(ksp)]

        w2, tap2 = [], []
        for k_t in range(kt):
            for kw in range(ksp):                      # conv_xt: taps in (T, W)
                w2.append(_complex_block(self.w_xt_re[k_t, 0, kw],
                                         self.w_xt_im[k_t, 0, kw]))
                tap2.append(("xt", k_t, kw))
        for k_t in range(kt):
            for kh in range(ksp):                      # conv_yt: taps in (T, H)
                w2.append(_complex_block(self.w_yt_re[k_t, kh, 0],
                                         self.w_yt_im[k_t, kh, 0]))
                tap2.append(("yt", k_t, kh))
        self.w2c = jnp.stack(w2)                       # (2*kt*ksp, 2Cout, 2Cmid)
        self.tap2 = tap2
        self.alpha2 = jnp.concatenate([self.alpha, self.alpha]).reshape(
            2 * out_channels, 1)

    def __call__(self, x_re, x_im):
        """x_re, x_im: (N, Cin, T, H, W) float32 (NCDHW complex split)."""
        N, Cin, T, H, W = x_re.shape
        ksp, kt = self.ksp, self.kt
        ph = pw = ksp // 2
        pt = kt // 2
        S = W + 2 * pw                       # common row stride of all planes
        c2in = 2 * Cin
        c2mid = 2 * self.inter_channels
        c2out = 2 * self.out_channels

        # lane-dense plane widths (multiples of 128 -> unmasked full-width stores)
        l_out2 = _round_up(H * S, 128)                       # stage-2 output plane
        max_off2 = max(ph * S + (ksp - 1), (ksp - 1) * S + pw)
        l_int = _round_up(max_off2 + l_out2, 128)            # intermediate plane
        max_off1 = (ksp - 1) * S + (ksp - 1)
        rows1 = -(-(max_off1 + l_int) // S)                  # ceil
        l_in1 = rows1 * S                                    # stage-1 input plane

        # stage-1 input: image placed at rows [2ph, 2ph+H), cols [2pw, 2pw+W) of a
        # zero (rows1, S) plane, complex packed as 2*Cin channels, flattened.
        x2 = jnp.concatenate([x_re, x_im], axis=1).astype(jnp.float32)
        x2 = jnp.transpose(x2, (0, 2, 1, 3, 4))              # (N, T, 2Cin, H, W)
        xp = jnp.pad(x2, ((0, 0), (0, 0), (0, 0),
                          (2 * ph, rows1 - 2 * ph - H),
                          (2 * pw, S - 2 * pw - W)))
        xp = xp.reshape(N, T, c2in, l_in1)

        # interior mask of the canonical padded plane (zeros border + tail).
        pos = jnp.arange(l_int, dtype=jnp.int32)
        r = pos // S
        c = pos % S
        mask = ((r >= ph) & (r < ph + H) & (c >= pw) & (c < pw + W))
        mask = mask.astype(jnp.float32).reshape(1, l_int)

        # ---- stage 1: conv_xy (1, ksp, ksp) -> padded intermediate ----
        tap1_off = [kh * S + kw for (kh, kw) in self.tap1]
        inter = _conv_stage1(xp, self.w1c, mask, tap1_off, l_int, T, pt)

        # ---- stage 2: fused conv_xt + conv_yt + add + cPReLU ----
        taps2 = []
        for kind, k_t, k_s in self.tap2:
            if kind == "xt":                 # H fixed at the center padded row
                taps2.append((k_t, ph * S + k_s))
            else:                            # "yt": W fixed at the center padded col
                taps2.append((k_t, k_s * S + pw))
        out = _conv_stage2_fused(inter, self.w2c, self.alpha2, taps2,
                                 kt, l_out2, T)              # (N, 2Cout, T*l_out2)

        out = out.reshape(N, c2out, T, l_out2)[:, :, :, :H * S]
        out = out.reshape(N, c2out, T, H, S)[..., :W]        # (N, 2Cout, T, H, W)
        return out[:, :self.out_channels], out[:, self.out_channels:]


# ----------------------------------------------------------------------------
# Pure-JAX reference (XLA convs) for a numerical self-check
# ----------------------------------------------------------------------------
def _reference_forward(model, x_re, x_im):
    dn = ("NCDHW", "DHWIO", "NCDHW")

    def conv(x, w):
        return lax.conv_general_dilated(x, w, (1, 1, 1), "SAME",
                                        dimension_numbers=dn)

    def cconv(xr, xi, wr, wi):
        return conv(xr, wr) - conv(xi, wi), conv(xr, wi) + conv(xi, wr)

    sp_r, sp_i = cconv(x_re, x_im, model.w_xy_re, model.w_xy_im)
    xt_r, xt_i = cconv(sp_r, sp_i, model.w_xt_re, model.w_xt_im)
    yt_r, yt_i = cconv(sp_r, sp_i, model.w_yt_re, model.w_yt_im)
    zr, zi = xt_r + yt_r, xt_i + yt_i
    a = model.alpha.reshape(1, -1, 1, 1, 1)
    return jnp.where(zr >= 0, zr, a * zr), jnp.where(zi >= 0, zi, a * zi)


if __name__ == "__main__":
    key = jax.random.PRNGKey(0)
    k_xr, k_xi, k_w = jax.random.split(key, 3)

    # small shapes: N=2, Cin=2, T=4, H=W=8, Cout=4
    N, Cin, T, H, W = 2, 2, 4, 8, 8
    Cout = 4

    x_re = jax.random.normal(k_xr, (N, Cin, T, H, W), jnp.float32)
    x_im = jax.random.normal(k_xi, (N, Cin, T, H, W), jnp.float32)

    model = ComplexSplitFastPallas(in_channels=Cin, inter_channels=0,
                                   out_channels=Cout, kernel_size_sp=3,
                                   kernel_size_t=3, key=k_w)

    y_re, y_im = model(x_re, x_im)
    jax.block_until_ready((y_re, y_im))

    assert y_re.shape == (N, Cout, T, H, W)
    assert y_im.shape == (N, Cout, T, H, W)

    r_re, r_im = _reference_forward(model, x_re, x_im)
    np.testing.assert_allclose(np.asarray(y_re), np.asarray(r_re),
                               rtol=1e-3, atol=1e-4)
    np.testing.assert_allclose(np.asarray(y_im), np.asarray(r_im),
                               rtol=1e-3, atol=1e-4)

    print("KERNEL_OK")
</pallas_src>

<mosaic_0001>
module attributes {stable_mosaic.version = 11 : i64} {
  func.func @kernel(%arg0: i32, %arg1: i32, %arg2: memref<1x1x4x280xf32, #tpu.memory_space<vmem>>, %arg3: memref<9x4x4xf32, #tpu.memory_space<vmem>>, %arg4: memref<1x256xf32, #tpu.memory_space<vmem>>, %arg5: memref<1x1x4x256xf32, #tpu.memory_space<vmem>>) attributes {dimension_semantics = [#tpu.dimension_semantics<parallel>, #tpu.dimension_semantics<parallel>], iteration_bounds = array<i64: 2, 6>, scalar_prefetch = 0 : i64, scratch_operands = 0 : i64, tpu.core_type = #tpu.core_type<tc>, window_params = [{transform_indices = @transform_0, window_bounds = array<i64: 1, 1, 4, 280>}, {pipeline_mode = #tpu.pipeline_mode<synchronous>, transform_indices = @transform_1, window_bounds = array<i64: 9, 4, 4>}, {pipeline_mode = #tpu.pipeline_mode<synchronous>, transform_indices = @transform_2, window_bounds = array<i64: 1, 256>}, {transform_indices = @transform_3, window_bounds = array<i64: 1, 1, 4, 256>}]} {
    %c1_i32 = arith.constant 1 : i32
    %0 = arith.cmpi sge, %arg1, %c1_i32 : i32
    %c5_i32 = arith.constant 5 : i32
    %1 = arith.cmpi slt, %arg1, %c5_i32 : i32
    %2 = arith.andi %0, %1 : i1
    %3 = arith.extui %2 : i1 to i32
    %c0_i32 = arith.constant 0 : i32
    %4 = arith.cmpi ne, %3, %c0_i32 : i32
    scf.if %4 {
      %c0 = arith.constant 0 : index
      %c0_1 = arith.constant 0 : index
      %c0_2 = arith.constant 0 : index
      %8 = vector.load %arg3[%c0, %c0_1, %c0_2] : memref<9x4x4xf32, #tpu.memory_space<vmem>>, vector<1x4x4xf32>
      %9 = vector.shape_cast %8 : vector<1x4x4xf32> to vector<4x4xf32>
      %c0_3 = arith.constant 0 : index
      %c0_4 = arith.constant 0 : index
      %c0_5 = arith.constant 0 : index
      %c0_6 = arith.constant 0 : index
      %10 = vector.load %arg2[%c0_3, %c0_4, %c0_5, %c0_6] : memref<1x1x4x280xf32, #tpu.memory_space<vmem>>, vector<1x1x4x256xf32>
      %11 = vector.shape_cast %10 : vector<1x1x4x256xf32> to vector<4x256xf32>
      %cst = arith.constant dense<0.000000e+00> : vector<4x256xf32>
      %12 = tpu.matmul %9, %11, %cst {dimension_numbers = #tpu.dot_dimension_numbers<[1], [0], [0], [1], [0, 0, 1, 1], [], []>} : vector<4x4xf32>, vector<4x256xf32>, vector<4x256xf32> -> vector<4x256xf32>
      %c1 = arith.constant 1 : index
      %c0_7 = arith.constant 0 : index
      %c0_8 = arith.constant 0 : index
      %13 = vector.load %arg3[%c1, %c0_7, %c0_8] : memref<9x4x4xf32, #tpu.memory_space<vmem>>, vector<1x4x4xf32>
      %14 = vector.shape_cast %13 : vector<1x4x4xf32> to vector<4x4xf32>
      %c0_9 = arith.constant 0 : index
      %c0_10 = arith.constant 0 : index
      %c0_11 = arith.constant 0 : index
      %c1_12 = arith.constant 1 : index
      %15 = vector.load %arg2[%c0_9, %c0_10, %c0_11, %c1_12] : memref<1x1x4x280xf32, #tpu.memory_space<vmem>>, vector<1x1x4x256xf32>
      %16 = vector.shape_cast %15 : vector<1x1x4x256xf32> to vector<4x256xf32>
      %cst_13 = arith.constant dense<0.000000e+00> : vector<4x256xf32>
      %17 = tpu.matmul %14, %16, %cst_13 {dimension_numbers = #tpu.dot_dimension_numbers<[1], [0], [0], [1], [0, 0, 1, 1], [], []>} : vector<4x4xf32>, vector<4x256xf32>, vector<4x256xf32> -> vector<4x256xf32>
      %18 = arith.addf %12, %17 : vector<4x256xf32>
      %c2 = arith.constant 2 : index
      %c0_14 = arith.constant 0 : index
      %c0_15 = arith.constant 0 : index
      %19 = vector.load %arg3[%c2, %c0_14, %c0_15] : memref<9x4x4xf32, #tpu.memory_space<vmem>>, vector<1x4x4xf32>
      %20 = vector.shape_cast %19 : vector<1x4x4xf32> to vector<4x4xf32>
      %c0_16 = arith.constant 0 : index
      %c0_17 = arith.constant 0 : index
      %c0_18 = arith.constant 0 : index
      %c2_19 = arith.constant 2 : index
      %21 = vector.load %arg2[%c0_16, %c0_17, %c0_18, %c2_19] : memref<1x1x4x280xf32, #tpu.memory_space<vmem>>, vector<1x1x4x256xf32>
      %22 = vector.shape_cast %21 : vector<1x1x4x256xf32> to vector<4x256xf32>
      %cst_20 = arith.constant dense<0.000000e+00> : vector<4x256xf32>
      %23 = tpu.matmul %20, %22, %cst_20 {dimension_numbers = #tpu.dot_dimension_numbers<[1], [0], [0], [1], [0, 0, 1, 1], [], []>} : vector<4x4xf32>, vector<4x256xf32>, vector<4x256xf32> -> vector<4x256xf32>
      %24 = arith.addf %18, %23 : vector<4x256xf32>
      %c3 = arith.constant 3 : index
      %c0_21 = arith.constant 0 : index
      %c0_22 = arith.constant 0 : index
      %25 = vector.load %arg3[%c3, %c0_21, %c0_22] : memref<9x4x4xf32, #tpu.memory_space<vmem>>, vector<1x4x4xf32>
      %26 = vector.shape_cast %25 : vector<1x4x4xf32> to vector<4x4xf32>
      %c0_23 = arith.constant 0 : index
      %c0_24 = arith.constant 0 : index
      %c0_25 = arith.constant 0 : index
      %c10 = arith.constant 10 : index
      %27 = vector.load %arg2[%c0_23, %c0_24, %c0_25, %c10] : memref<1x1x4x280xf32, #tpu.memory_space<vmem>>, vector<1x1x4x256xf32>
      %28 = vector.shape_cast %27 : vector<1x1x4x256xf32> to vector<4x256xf32>
      %cst_26 = arith.constant dense<0.000000e+00> : vector<4x256xf32>
      %29 = tpu.matmul %26, %28, %cst_26 {dimension_numbers = #tpu.dot_dimension_numbers<[1], [0], [0], [1], [0, 0, 1, 1], [], []>} : vector<4x4xf32>, vector<4x256xf32>, vector<4x256xf32> -> vector<4x256xf32>
      %30 = arith.addf %24, %29 : vector<4x256xf32>
      %c4 = arith.constant 4 : index
      %c0_27 = arith.constant 0 : index
      %c0_28 = arith.constant 0 : index
      %31 = vector.load %arg3[%c4, %c0_27, %c0_28] : memref<9x4x4xf32, #tpu.memory_space<vmem>>, vector<1x4x4xf32>
      %32 = vector.shape_cast %31 : vector<1x4x4xf32> to vector<4x4xf32>
      %c0_29 = arith.constant 0 : index
      %c0_30 = arith.constant 0 : index
      %c0_31 = arith.constant 0 : index
      %c11 = arith.constant 11 : index
      %33 = vector.load %arg2[%c0_29, %c0_30, %c0_31, %c11] : memref<1x1x4x280xf32, #tpu.memory_space<vmem>>, vector<1x1x4x256xf32>
      %34 = vector.shape_cast %33 : vector<1x1x4x256xf32> to vector<4x256xf32>
      %cst_32 = arith.constant dense<0.000000e+00> : vector<4x256xf32>
      %35 = tpu.matmul %32, %34, %cst_32 {dimension_numbers = #tpu.dot_dimension_numbers<[1], [0], [0], [1], [0, 0, 1, 1], [], []>} : vector<4x4xf32>, vector<4x256xf32>, vector<4x256xf32> -> vector<4x256xf32>
      %36 = arith.addf %30, %35 : vector<4x256xf32>
      %c5 = arith.constant 5 : index
      %c0_33 = arith.constant 0 : index
      %c0_34 = arith.constant 0 : index
      %37 = vector.load %arg3[%c5, %c0_33, %c0_34] : memref<9x4x4xf32, #tpu.memory_space<vmem>>, vector<1x4x4xf32>
      %38 = vector.shape_cast %37 : vector<1x4x4xf32> to vector<4x4xf32>
      %c0_35 = arith.constant 0 : index
      %c0_36 = arith.constant 0 : index
      %c0_37 = arith.constant 0 : index
      %c12 = arith.constant 12 : index
      %39 = vector.load %arg2[%c0_35, %c0_36, %c0_37, %c12] : memref<1x1x4x280xf32, #tpu.memory_space<vmem>>, vector<1x1x4x256xf32>
      %40 = vector.shape_cast %39 : vector<1x1x4x256xf32> to vector<4x256xf32>
      %cst_38 = arith.constant dense<0.000000e+00> : vector<4x256xf32>
      %41 = tpu.matmul %38, %40, %cst_38 {dimension_numbers = #tpu.dot_dimension_numbers<[1], [0], [0], [1], [0, 0, 1, 1], [], []>} : vector<4x4xf32>, vector<4x256xf32>, vector<4x256xf32> -> vector<4x256xf32>
      %42 = arith.addf %36, %41 : vector<4x256xf32>
      %c6 = arith.constant 6 : index
      %c0_39 = arith.constant 0 : index
      %c0_40 = arith.constant 0 : index
      %43 = vector.load %arg3[%c6, %c0_39, %c0_40] : memref<9x4x4xf32, #tpu.memory_space<vmem>>, vector<1x4x4xf32>
      %44 = vector.shape_cast %43 : vector<1x4x4xf32> to vector<4x4xf32>
      %c0_41 = arith.constant 0 : index
      %c0_42 = arith.constant 0 : index
      %c0_43 = arith.constant 0 : index
      %c20 = arith.constant 20 : index
      %45 = vector.load %arg2[%c0_41, %c0_42, %c0_43, %c20] : memref<1x1x4x280xf32, #tpu.memory_space<vmem>>, vector<1x1x4x256xf32>
      %46 = vector.shape_cast %45 : vector<1x1x4x256xf32> to vector<4x256xf32>
      %cst_44 = arith.constant dense<0.000000e+00> : vector<4x256xf32>
      %47 = tpu.matmul %44, %46, %cst_44 {dimension_numbers = #tpu.dot_dimension_numbers<[1], [0], [0], [1], [0, 0, 1, 1], [], []>} : vector<4x4xf32>, vector<4x256xf32>, vector<4x256xf32> -> vector<4x256xf32>
      %48 = arith.addf %42, %47 : vector<4x256xf32>
      %c7 = arith.constant 7 : index
      %c0_45 = arith.constant 0 : index
      %c0_46 = arith.constant 0 : index
      %49 = vector.load %arg3[%c7, %c0_45, %c0_46] : memref<9x4x4xf32, #tpu.memory_space<vmem>>, vector<1x4x4xf32>
      %50 = vector.shape_cast %49 : vector<1x4x4xf32> to vector<4x4xf32>
      %c0_47 = arith.constant 0 : index
      %c0_48 = arith.constant 0 : index
      %c0_49 = arith.constant 0 : index
      %c21 = arith.constant 21 : index
      %51 = vector.load %arg2[%c0_47, %c0_48, %c0_49, %c21] : memref<1x1x4x280xf32, #tpu.memory_space<vmem>>, vector<1x1x4x256xf32>
      %52 = vector.shape_cast %51 : vector<1x1x4x256xf32> to vector<4x256xf32>
      %cst_50 = arith.constant dense<0.000000e+00> : vector<4x256xf32>
      %53 = tpu.matmul %50, %52, %cst_50 {dimension_numbers = #tpu.dot_dimension_numbers<[1], [0], [0], [1], [0, 0, 1, 1], [], []>} : vector<4x4xf32>, vector<4x256xf32>, vector<4x256xf32> -> vector<4x256xf32>
      %54 = arith.addf %48, %53 : vector<4x256xf32>
      %c8 = arith.constant 8 : index
      %c0_51 = arith.constant 0 : index
      %c0_52 = arith.constant 0 : index
      %55 = vector.load %arg3[%c8, %c0_51, %c0_52] : memref<9x4x4xf32, #tpu.memory_space<vmem>>, vector<1x4x4xf32>
      %56 = vector.shape_cast %55 : vector<1x4x4xf32> to vector<4x4xf32>
      %c0_53 = arith.constant 0 : index
      %c0_54 = arith.constant 0 : index
      %c0_55 = arith.constant 0 : index
      %c22 = arith.constant 22 : index
      %57 = vector.load %arg2[%c0_53, %c0_54, %c0_55, %c22] : memref<1x1x4x280xf32, #tpu.memory_space<vmem>>, vector<1x1x4x256xf32>
      %58 = vector.shape_cast %57 : vector<1x1x4x256xf32> to vector<4x256xf32>
      %cst_56 = arith.constant dense<0.000000e+00> : vector<4x256xf32>
      %59 = tpu.matmul %56, %58, %cst_56 {dimension_numbers = #tpu.dot_dimension_numbers<[1], [0], [0], [1], [0, 0, 1, 1], [], []>} : vector<4x4xf32>, vector<4x256xf32>, vector<4x256xf32> -> vector<4x256xf32>
      %60 = arith.addf %54, %59 : vector<4x256xf32>
      %c0_57 = arith.constant 0 : index
      %c0_58 = arith.constant 0 : index
      %61 = vector.load %arg4[%c0_57, %c0_58] : memref<1x256xf32, #tpu.memory_space<vmem>>, vector<1x256xf32>
      %62 = vector.broadcast %61 : vector<1x256xf32> to vector<4x256xf32>
      %63 = arith.mulf %60, %62 : vector<4x256xf32>
      %c0_59 = arith.constant 0 : index
      %c0_60 = arith.constant 0 : index
      %c0_61 = arith.constant 0 : index
      %c0_62 = arith.constant 0 : index
      %64 = vector.load %arg5[%c0_59, %c0_60, %c0_61, %c0_62] : memref<1x1x4x256xf32, #tpu.memory_space<vmem>>, vector<1x1x4x256xf32>
      %65 = vector.shape_cast %64 : vector<1x1x4x256xf32> to vector<4x256xf32>
      %66 = vector.shape_cast %63 : vector<4x256xf32> to vector<1x1x4x256xf32>
      tpu.vector_store %arg5[%c0_59, %c0_60, %c0_61, %c0_62], %66 {strides = array<i32>} : memref<1x1x4x256xf32, #tpu.memory_space<vmem>>, vector<1x1x4x256xf32>,
    } else {
    }
    %true = arith.constant true
    %5 = arith.xori %2, %true : i1
    %6 = arith.extui %5 : i1 to i32
    %c0_i32_0 = arith.constant 0 : i32
    %7 = arith.cmpi ne, %6, %c0_i32_0 : i32
    scf.if %7 {
      %cst = arith.constant 0.000000e+00 : f32
      %8 = vector.broadcast %cst : f32 to vector<4x256xf32>
      %c0 = arith.constant 0 : index
      %c0_1 = arith.constant 0 : index
      %c0_2 = arith.constant 0 : index
      %c0_3 = arith.constant 0 : index
      %9 = vector.load %arg5[%c0, %c0_1, %c0_2, %c0_3] : memref<1x1x4x256xf32, #tpu.memory_space<vmem>>, vector<1x1x4x256xf32>
      %10 = vector.shape_cast %9 : vector<1x1x4x256xf32> to vector<4x256xf32>
      %11 = vector.shape_cast %8 : vector<4x256xf32> to vector<1x1x4x256xf32>
      tpu.vector_store %arg5[%c0, %c0_1, %c0_2, %c0_3], %11 {strides = array<i32>} : memref<1x1x4x256xf32, #tpu.memory_space<vmem>>, vector<1x1x4x256xf32>,
    } else {
    }
    return
  }
  func.func @transform_0(%arg0: i32, %arg1: i32) -> (i32, i32, i32, i32) {
    %c1_i32 = arith.constant 1 : i32
    %0 = arith.subi %arg1, %c1_i32 : i32
    %c0_i32 = arith.constant 0 : i32
    %c3_i32 = arith.constant 3 : i32
    %1 = arith.maxsi %c0_i32, %0 : i32
    %2 = arith.minsi %c3_i32, %1 : i32
    %c0_i32_0 = arith.constant 0 : i32
    %c0_i32_1 = arith.constant 0 : i32
    %c0_i32_2 = arith.constant 0 : i32
    return %arg0, %2, %c0_i32_0, %c0_i32_1 : i32, i32, i32, i32
  }
  func.func @transform_1(%arg0: i32, %arg1: i32) -> (i32, i32, i32) {
    %c0_i32 = arith.constant 0 : i32
    %c0_i32_0 = arith.constant 0 : i32
    %c0_i32_1 = arith.constant 0 : i32
    %c0_i32_2 = arith.constant 0 : i32
    return %c0_i32, %c0_i32_0, %c0_i32_1 : i32, i32, i32
  }
  func.func @transform_2(%arg0: i32, %arg1: i32) -> (i32, i32) {
    %c0_i32 = arith.constant 0 : i32
    %c0_i32_0 = arith.constant 0 : i32
    %c0_i32_1 = arith.constant 0 : i32
    return %c0_i32, %c0_i32_0 : i32, i32
  }
  func.func @transform_3(%arg0: i32, %arg1: i32) -> (i32, i32, i32, i32) {
    %c0_i32 = arith.constant 0 : i32
    %c0_i32_0 = arith.constant 0 : i32
    %c0_i32_1 = arith.constant 0 : i32
    return %arg0, %arg1, %c0_i32, %c0_i32_0 : i32, i32, i32, i32
  }
}

</mosaic_0001>

<llo_original>
// kernel: tpu_custom_call.1
$region0: #{tpu_custom_call.1}
  #allocation0 [shape = 'u32[]', space=smem, size = 0x4, offset = 0x4, fixed_abs, tag = 'smem constant byte address 0x4 - core index']
  #allocation1 [shape = 'u32[144,128]{1,0:T(1,128)}', space=vmem, size = 0x12000, scoped, tag = 'internal scratch']
  %s0 = inlined_call_operand.hbm [shape: f32[2,4,4,280], index: 0, kind: input, shape index: {}]
  %s1 = inlined_call_operand.vmem [shape: f32[9,4,4], index: 1, kind: input, shape index: {}]
  %s2 = inlined_call_operand.vmem [shape: f32[1,256], index: 2, kind: input, shape index: {}]
  %s3 = inlined_call_operand.hbm [shape: f32[2,6,4,256], index: 3, kind: output, shape index: {}]
  %s4 = sld [smem:[#allocation0]]
  $region57: #{tpu_custom_call.1} parent=0
    _
  %s6 = ssub.s32 1, %s4
  %s7 = scalar_select 0, %s6, %s4
  $region1: #{tpu_custom_call.1} parent=0
    #allocation2 [shape = 'u8[12288]{0}', space=vmem, size = 0x3000, scoped, tag = 'input window, operand 0']
    #allocation3 [shape = 's32[2]{0}', space=sflag, size = 0x8, scoped, tag = 'scoped memory for tpu_custom_call.1']
    #allocation4 [shape = 's32[2]{0}', space=sflag, size = 0x8, scoped, tag = 'scoped memory for tpu_custom_call.1']
    #allocation5 [shape = 'u8[8192]{0}', space=vmem, size = 0x2000, scoped, tag = 'output window, operand 0']
    %8 = vsyncpa [#allocation3], 0
    %s9 = scalar_lea.sflag [#allocation3], 1
    %10 = vsyncpa %s9, 0
    %11 = vsyncpa [#allocation4], 0
    %s12 = scalar_lea.sflag [#allocation4], 1
    %13 = vsyncpa %s12, 0
    loop: start=0, step=1, limit=14
    $region2: #{tpu_custom_call.1} parent=1 // loop_pre_header
      _
    $region3: #{tpu_custom_call.1} parent=1 // loop_header
      %s15 = sphi 0, %s19
      %p16 = scmp.ge.s32.totalorder %s15, 14
      %s22 = sphi 0, %s34
      %s23 = sphi 0, %s30
      %s24 = sphi 0, %s22
      %s25 = sphi 0, %s23
      %s26 = sphi 0, %s24
      %s27 = sphi 0, %s25
      %s49 = sphi 0, %s51
      %s52 = sphi 0, %s49
      %s53 = sphi 0, %s52
      %s69 = sphi 0, %s53
      %s73 = sphi 0, %s73
      %s75 = sphi 0, %s73
      %s76 = sphi 0, %s75
      %s90 = sphi 0, %s76
      %s94 = sphi 0, %s94
      %s96 = sphi 0, %s94
      %s97 = sphi 0, %s96
      %s111 = sphi 0, %s97
      %s119 = sphi 0, %s121
      %s122 = sphi 0, %s119
      %s123 = sphi 0, %s122
      %s139 = sphi 0, %s123
    $region4: #{tpu_custom_call.1} parent=1 // loop_header_branch
      %18 = sbr.rel (%p16) target = $region8
    $region5: #{tpu_custom_call.1} parent=1 // loop_body
      %s20 = ssub.s32 %s15, 1
      %s21 = ssub.s32 %s15, 2
      %s28 = sadd.s32 1, %s23
      %p29 = scmp.ge.s32.totalorder %s28, 6
      %s30 = scalar_select %p29, 0, %s28
      %s31 = sadd.s32 1, %s22
      %s32 = scalar_select %p29, %s31, %s22
      %p33 = scmp.ge.s32.totalorder %s32, 2
      %s34 = scalar_select %p33, 0, %s32
      %s35 = ssub.s32 %s23, 1
      %p36 = scmp.gt.s32.totalorder %s35, 0
      %s37 = scalar_select %p36, %s35, 0
      %p38 = scmp.lt.s32.totalorder %s37, 3
      %s39 = scalar_select %p38, %s37, 3
      %s40 = ssub.s32 %s30, 1
      %p41 = scmp.gt.s32.totalorder %s40, 0
      %s42 = scalar_select %p41, %s40, 0
      %p43 = scmp.lt.s32.totalorder %s42, 3
      %s44 = scalar_select %p43, %s42, 3
      %s45 = ssub.s32 %s22, %s34
      %s46 = ssub.s32 %s39, %s44
      %s47 = sor.u32 %s45, %s46
      %p48 = scmp.eq.s32.totalorder %s47, 0
      %s50 = sadd.s32 %s49, 1
      %s51 = scalar_select %p48, %s49, %s50
      %p54 = pneg %p48
      %p55 = scmp.eq.s32.totalorder %s15, 11
      %p56 = por %p54, %p55
      %p57 = scmp.ne.s32.totalorder %s49, %s52
      %p58 = scmp.eq.s32.totalorder %s15, 0
      %p59 = por %p57, %p58
      %p60 = scmp.ne.s32.totalorder %s49, %s52
      %p61 = scmp.eq.s32.totalorder %s20, 11
      %p62 = por %p60, %p61
      %p63 = scmp.ne.s32.totalorder %s52, %s53
      %p64 = scmp.eq.s32.totalorder %s20, 0
      %p65 = por %p63, %p64
      %p66 = scmp.ne.s32.totalorder %s52, %s53
      %p67 = scmp.eq.s32.totalorder %s21, 11
      %p68 = por %p66, %p67
      %p70 = scmp.ne.s32.totalorder %s53, %s69
      %p71 = scmp.eq.s32.totalorder %s21, 0
      %p72 = por %p70, %p71
      %s74 = sadd.s32 %s73, 1
      %p77 = scmp.eq.s32.totalorder %s15, 11
      %p78 = scmp.ne.s32.totalorder %s73, %s75
      %p79 = scmp.eq.s32.totalorder %s15, 0
      %p80 = por %p78, %p79
      %p81 = scmp.ne.s32.totalorder %s73, %s75
      %p82 = scmp.eq.s32.totalorder %s20, 11
      %p83 = por %p81, %p82
      %p84 = scmp.ne.s32.totalorder %s75, %s76
      %p85 = scmp.eq.s32.totalorder %s20, 0
      %p86 = por %p84, %p85
      %p87 = scmp.ne.s32.totalorder %s75, %s76
      %p88 = scmp.eq.s32.totalorder %s21, 11
      %p89 = por %p87, %p88
      %p91 = scmp.ne.s32.totalorder %s76, %s90
      %p92 = scmp.eq.s32.totalorder %s21, 0
      %p93 = por %p91, %p92
      %s95 = sadd.s32 %s94, 1
      %p98 = scmp.eq.s32.totalorder %s15, 11
      %p99 = scmp.ne.s32.totalorder %s94, %s96
      %p100 = scmp.eq.s32.totalorder %s15, 0
      %p101 = por %p99, %p100
      %p102 = scmp.ne.s32.totalorder %s94, %s96
      %p103 = scmp.eq.s32.totalorder %s20, 11
      %p104 = por %p102, %p103
      %p105 = scmp.ne.s32.totalorder %s96, %s97
      %p106 = scmp.eq.s32.totalorder %s20, 0
      %p107 = por %p105, %p106
      %p108 = scmp.ne.s32.totalorder %s96, %s97
      %p109 = scmp.eq.s32.totalorder %s21, 11
      %p110 = por %p108, %p109
      %p112 = scmp.ne.s32.totalorder %s97, %s111
      %p113 = scmp.eq.s32.totalorder %s21, 0
      %p114 = por %p112, %p113
      %s115 = ssub.s32 %s22, %s34
      %s116 = ssub.s32 %s23, %s30
      %s117 = sor.u32 %s115, %s116
      %p118 = scmp.eq.s32.totalorder %s117, 0
      %s120 = sadd.s32 %s119, 1
      %s121 = scalar_select %p118, %s119, %s120
      %p124 = pneg %p118
      %p125 = scmp.eq.s32.totalorder %s15, 11
      %p126 = por %p124, %p125
      %p127 = scmp.ne.s32.totalorder %s119, %s122
      %p128 = scmp.eq.s32.totalorder %s15, 0
      %p129 = por %p127, %p128
      %p130 = scmp.ne.s32.totalorder %s119, %s122
      %p131 = scmp.eq.s32.totalorder %s20, 11
      %p132 = por %p130, %p131
      %p133 = scmp.ne.s32.totalorder %s122, %s123
      %p134 = scmp.eq.s32.totalorder %s20, 0
      %p135 = por %p133, %p134
      %p136 = scmp.ne.s32.totalorder %s122, %s123
      %p137 = scmp.eq.s32.totalorder %s21, 11
      %p138 = por %p136, %p137
      %p140 = scmp.ne.s32.totalorder %s123, %s139
      %p141 = scmp.eq.s32.totalorder %s21, 0
      %p142 = por %p140, %p141
      %p143 = scmp.le.s32.totalorder 1, %s15
      %p144 = scmp.lt.s32.totalorder %s15, 13
      %p145 = pnand %p143, %p144
      %p146 = pneg %p145
      // Predicated region
      $region9: #{tpu_custom_call.1} parent=5 // pred_check
        _
      $region10: #{tpu_custom_call.1} parent=5 // pred_check_branch
        %148 = sbr.rel (%p145) target = $region12
      $region11: #{tpu_custom_call.1} parent=5 // pred_region
        %s149 = ssub.s32 %s15, 1
        // Predicated region
        $region13: #{tpu_custom_call.1} parent=11 // pred_check
          %p150 = pneg %p86
        $region14: #{tpu_custom_call.1} parent=11 // pred_check_branch
          %152 = sbr.rel (%p150) target = $region16
        $region15: #{tpu_custom_call.1} parent=11 // pred_region
          _
        $region16: #{tpu_custom_call.1} parent=11 // pred_fallthru
          _
        // Predicated region
        $region17: #{tpu_custom_call.1} parent=11 // pred_check
          %p153 = pneg %p107
        $region18: #{tpu_custom_call.1} parent=11 // pred_check_branch
          %155 = sbr.rel (%p153) target = $region20
        $region19: #{tpu_custom_call.1} parent=11 // pred_region
          _
        $region20: #{tpu_custom_call.1} parent=11 // pred_fallthru
          _
      $region12: #{tpu_custom_call.1} parent=5 // pred_fallthru
        _
      %p156 = scmp.lt.s32.totalorder %s15, 12
      // Predicated region
      $region21: #{tpu_custom_call.1} parent=5 // pred_check
        %p157 = pneg %p156
      $region22: #{tpu_custom_call.1} parent=5 // pred_check_branch
        %159 = sbr.rel (%p157) target = $region24
      $region23: #{tpu_custom_call.1} parent=5 // pred_region
        // Predicated region
        $region25: #{tpu_custom_call.1} parent=23 // pred_check
          %p160 = pneg %p59
        $region26: #{tpu_custom_call.1} parent=23 // pred_check_branch
          %162 = sbr.rel (%p160) target = $region28
        $region27: #{tpu_custom_call.1} parent=23 // pred_region
          %s163 = sand.u32 %s49, 1
          %s164 = scalar_lea.sflag [#allocation3], %s163
          %s165 = sand.u32 %s49, 1
          %s166 = smul.addr %s165, 12
          %s167 = scalar_lea.vmem [#allocation2], %s166
          %s168 = ssub.s32 %s23, 1
          %p169 = scmp.gt.s32.totalorder %s168, 0
          %s170 = scalar_select %p169, %s168, 0
          %p171 = scmp.lt.s32.totalorder %s170, 3
          %s172 = scalar_select %p171, %s170, 3
          %s174 = ssub.s32 192, 192
          %175 = vsyncadd %s164, %s174
          %s176 = smul.addr %s172, 3
          %s177 = smul.addr %s22, 12
          %s178 = sadd.s32 %s176, %s177
          %s179 = smul.addr %s178, 64
          %s180 = scalar_lea.hbm %s0, %s179
          %s182 = sshll.u32 %s167, 4
          %s183 = int_to_ptr.vmem [resolvable:$true] %s182
          %185 = dma.hbm_to_vmem [thread:$0]  %s180, 192, %s183, %s164
        $region28: #{tpu_custom_call.1} parent=23 // pred_fallthru
          _
      $region24: #{tpu_custom_call.1} parent=5 // pred_fallthru
        _
      %p186 = scmp.le.s32.totalorder 1, %s15
      %p187 = scmp.lt.s32.totalorder %s15, 13
      %p188 = pnand %p186, %p187
      %p189 = pneg %p188
      // Predicated region
      $region29: #{tpu_custom_call.1} parent=5 // pred_check
        _
      $region30: #{tpu_custom_call.1} parent=5 // pred_check_branch
        %191 = sbr.rel (%p188) target = $region32
      $region31: #{tpu_custom_call.1} parent=5 // pred_region
        %s192 = ssub.s32 %s15, 1
        %s193 = sand.u32 %s52, 1
        %s194 = scalar_lea.sflag [#allocation3], %s193
        %s195 = sand.u32 %s52, 1
        %s196 = smul.addr %s195, 12
        %s197 = scalar_lea.vmem [#allocation2], %s196
        // Predicated region
        $region33: #{tpu_custom_call.1} parent=31 // pred_check
          %p198 = pneg %p65
        $region34: #{tpu_custom_call.1} parent=31 // pred_check_branch
          %200 = sbr.rel (%p198) target = $region36
        $region35: #{tpu_custom_call.1} parent=31 // pred_region
          %201 = dma.done %s194, 192
        $region36: #{tpu_custom_call.1} parent=31 // pred_fallthru
          _
        %s202 = sand.u32 %s52, 1
        %s203 = scalar_lea.sflag [#allocation3], %s202
        %s204 = sand.u32 %s52, 1
        %s205 = smul.addr %s204, 12
        %s206 = scalar_lea.vmem [#allocation2], %s205
        %p207 = pneg %p65
        %p208 = pneg %p62
        %p209 = pneg %p86
        %p210 = pneg %p83
        %p211 = pneg %p107
        %p212 = pneg %p104
        %p213 = pneg %p135
        %p214 = pneg %p132
        %s215 = sand.u32 %s122, 1
        %s216 = scalar_lea.sflag [#allocation4], %s215
        %s217 = sand.u32 %s122, 1
        %s218 = smul.addr %s217, 8
        %s219 = scalar_lea.vmem [#allocation5], %s218
        %s220 = ssub.s32 %s25, 1
        %p221 = scmp.gt.s32.totalorder %s220, 0
        %s222 = scalar_select %p221, %s220, 0
        %p223 = scmp.lt.s32.totalorder %s222, 3
        %s224 = scalar_select %p223, %s222, 3
        %p225 = scmp.ge.s32.totalorder %s25, 1
        %p226 = scmp.lt.s32.totalorder %s25, 5
        %p227 = pnand %p225, %p226
        %p228 = pneg %p227
        // Predicated region
        $region37: #{tpu_custom_call.1} parent=31 // pred_check
          _
        $region38: #{tpu_custom_call.1} parent=31 // pred_check_branch
          %230 = sbr.rel (%p227) target = $region40
        $region39: #{tpu_custom_call.1} parent=31 // pred_region
          %v231 = vld [vmem:[%s1] sm:$0xf]
          %v232 = vld [vmem:[%s197] sm:$0xff]
          %s233 = scalar_lea.vmem %s1, 4
          %v234 = vld [vmem:[%s233] sm:$0xf]
          %v235 = vld [vmem:[%s197 + $0x8] sm:$0xf]
          %v238 = vcombine.high %v232, %v232
          %239 = vrot.lane.b32.xlu0 %v232, 127
          %v240 = vpop.permute.xlu0 %239
          %241 = vrot.lane.b32.xlu0 %v238, 127
          %v242 = vpop.permute.xlu0 %241
          %243 = vrot.lane.b32.xlu0 %v235, 127
          %v244 = vpop.permute.xlu0 %243
          %vm245 = vcmask 1039360
          %v246 = vsel %vm245, %v240, %v242
          %v247 = vsel %vm245, %v242, %v244
          %vm248 = vcmask 31744
          %v250 = vsel %vm248, %v234, 0
          %vm252 = vcmask 1043456
          %v253 = vsel %vm252, %v246, 0
          %v255 = vsel %vm252, %v247, 0
          %257 = vmatprep.subr.mxu0 0.0
          %258 = vmatpush1.msra.mxu0 0.0
          %259 = vmatprep.subr.mxu0 0.0
          %260 = vmatpush1.msra.mxu0 0.0
          %261 = vmatprep.subr.mxu0 0.0
          %262 = vmatpush1.msra.mxu0 0.0
          %263 = vmatprep.subr.mxu0 0.0
          %264 = vmatpush1.msra.mxu0 0.0
          %265 = vmatprep.subr.mxu0 0.0
          %266 = vmatpush1.msra.mxu0 0.0
          %267 = vmatprep.subr.mxu0 0.0
          %268 = vmatpush1.msra.mxu0 0.0
          %269 = vmatprep.subr.mxu0 0.0
          %270 = vmatpush1.msra.mxu0 0.0
          %271 = vmatprep.subr.mxu0 0.0
          %272 = vmatpush1.msra.mxu0 0.0
          %273 = vmatprep.subr.mxu0 0.0
          %274 = vmatpush1.msra.mxu0 0.0
          %275 = vmatprep.subr.mxu0 0.0
          %276 = vmatpush1.msra.mxu0 0.0
          %277 = vmatprep.subr.mxu0 0.0
          %278 = vmatpush1.msra.mxu0 0.0
          %279 = vmatprep.subr.mxu0 0.0
          %280 = vmatpush1.msra.mxu0 0.0
          %281 = vmatprep.subr.mxu0 0.0
          %282 = vmatpush1.msra.mxu0 0.0
          %283 = vmatprep.subr.mxu0 0.0
          %284 = vmatpush1.msra.mxu0 0.0
          %285 = vmatprep.subr.mxu0 0.0
          %286 = vmatpush1.msra.mxu0 0.0
          %287 = vmatprep.subr.mxu0 %v255
          %288 = vmatpush1.msra.mxu0 %v253
          %289 = vmatprep.subr.mxu0 0.0
          %290 = vmatpush2.msra.mxu0 0.0
          %291 = vmatprep.subr.mxu0 0.0
          %292 = vmatpush2.msra.mxu0 0.0
          %293 = vmatprep.subr.mxu0 0.0
          %294 = vmatpush2.msra.mxu0 0.0
          %295 = vmatprep.subr.mxu0 0.0
          %296 = vmatpush2.msra.mxu0 0.0
          %297 = vmatprep.subr.mxu0 0.0
          %298 = vmatpush2.msra.mxu0 0.0
          %299 = vmatprep.subr.mxu0 0.0
          %300 = vmatpush2.msra.mxu0 0.0
          %301 = vmatprep.subr.mxu0 0.0
          %302 = vmatpush2.msra.mxu0 0.0
          %303 = vmatprep.subr.mxu0 0.0
          %304 = vmatpush2.msra.mxu0 0.0
          %305 = vmatprep.subr.mxu0 0.0
          %306 = vmatpush2.msra.mxu0 0.0
          %307 = vmatprep.subr.mxu0 0.0
          %308 = vmatpush2.msra.mxu0 0.0
          %309 = vmatprep.subr.mxu0 0.0
          %310 = vmatpush2.msra.mxu0 0.0
          %311 = vmatprep.subr.mxu0 0.0
          %312 = vmatpush2.msra.mxu0 0.0
          %313 = vmatprep.subr.mxu0 0.0
          %314 = vmatpush2.msra.mxu0 0.0
          %315 = vmatprep.subr.mxu0 0.0
          %316 = vmatpush2.msra.mxu0 0.0
          %317 = vmatprep.subr.mxu0 0.0
          %318 = vmatpush2.msra.mxu0 0.0
          %319 = vmatprep.subr.mxu0 0.0
          %320 = vmatpush2.msra.mxu0 0.0
          %321 = vmatprep.mubr.f32.mxu0 0.0
          %322 = vmatmul.mubr.f32.gmra.mxu0 %v250
          %v323 = vpop.f32.mrf.mxu0
          %v324 = vadd.f32 0.0, %v323
          %v325 = vpop.f32.mrf.mxu0
          %v326 = vadd.f32 0.0, %v325
          %327 = vdwg.mxu0
          %v329 = vsel %vm248, %v231, 0
          %v331 = vsel %vm252, %v232, 0
          %v333 = vsel %vm252, %v238, 0
          %335 = vmatprep.subr.mxu0 0.0
          %336 = vmatpush1.msra.mxu0 0.0
          %337 = vmatprep.subr.mxu0 0.0
          %338 = vmatpush1.msra.mxu0 0.0
          %339 = vmatprep.subr.mxu0 0.0
          %340 = vmatpush1.msra.mxu0 0.0
          %341 = vmatprep.subr.mxu0 0.0
          %342 = vmatpush1.msra.mxu0 0.0
          %343 = vmatprep.subr.mxu0 0.0
          %344 = vmatpush1.msra.mxu0 0.0
          %345 = vmatprep.subr.mxu0 0.0
          %346 = vmatpush1.msra.mxu0 0.0
          %347 = vmatprep.subr.mxu0 0.0
          %348 = vmatpush1.msra.mxu0 0.0
          %349 = vmatprep.subr.mxu0 0.0
          %350 = vmatpush1.msra.mxu0 0.0
          %351 = vmatprep.subr.mxu0 0.0
          %352 = vmatpush1.msra.mxu0 0.0
          %353 = vmatprep.subr.mxu0 0.0
          %354 = vmatpush1.msra.mxu0 0.0
          %355 = vmatprep.subr.mxu0 0.0
          %356 = vmatpush1.msra.mxu0 0.0
          %357 = vmatprep.subr.mxu0 0.0
          %358 = vmatpush1.msra.mxu0 0.0
          %359 = vmatprep.subr.mxu0 0.0
          %360 = vmatpush1.msra.mxu0 0.0
          %361 = vmatprep.subr.mxu0 0.0
          %362 = vmatpush1.msra.mxu0 0.0
          %363 = vmatprep.subr.mxu0 0.0
          %364 = vmatpush1.msra.mxu0 0.0
          %365 = vmatprep.subr.mxu0 %v333
          %366 = vmatpush1.msra.mxu0 %v331
          %367 = vmatprep.subr.mxu0 0.0
          %368 = vmatpush2.msra.mxu0 0.0
          %369 = vmatprep.subr.mxu0 0.0
          %370 = vmatpush2.msra.mxu0 0.0
          %371 = vmatprep.subr.mxu0 0.0
          %372 = vmatpush2.msra.mxu0 0.0
          %373 = vmatprep.subr.mxu0 0.0
          %374 = vmatpush2.msra.mxu0 0.0
          %375 = vmatprep.subr.mxu0 0.0
          %376 = vmatpush2.msra.mxu0 0.0
          %377 = vmatprep.subr.mxu0 0.0
          %378 = vmatpush2.msra.mxu0 0.0
          %379 = vmatprep.subr.mxu0 0.0
          %380 = vmatpush2.msra.mxu0 0.0
          %381 = vmatprep.subr.mxu0 0.0
          %382 = vmatpush2.msra.mxu0 0.0
          %383 = vmatprep.subr.mxu0 0.0
          %384 = vmatpush2.msra.mxu0 0.0
          %385 = vmatprep.subr.mxu0 0.0
          %386 = vmatpush2.msra.mxu0 0.0
          %387 = vmatprep.subr.mxu0 0.0
          %388 = vmatpush2.msra.mxu0 0.0
          %389 = vmatprep.subr.mxu0 0.0
          %390 = vmatpush2.msra.mxu0 0.0
          %391 = vmatprep.subr.mxu0 0.0
          %392 = vmatpush2.msra.mxu0 0.0
          %393 = vmatprep.subr.mxu0 0.0
          %394 = vmatpush2.msra.mxu0 0.0
          %395 = vmatprep.subr.mxu0 0.0
          %396 = vmatpush2.msra.mxu0 0.0
          %397 = vmatprep.subr.mxu0 0.0
          %398 = vmatpush2.msra.mxu0 0.0
          %399 = vmatprep.mubr.f32.mxu0 0.0
          %400 = vmatmul.mubr.f32.gmra.mxu0 %v329
          %v401 = vpop.f32.mrf.mxu0
          %v402 = vadd.f32 %v324, %v401
          %v403 = vpop.f32.mrf.mxu0
          %v404 = vadd.f32 %v326, %v403
          %405 = vdwg.mxu0
          %s406 = scalar_lea.vmem %s1, 8
          %v407 = vld [vmem:[%s406] sm:$0xf]
          %v408 = vld [vmem:[%s197] sm:$0xff]
          %v409 = vld [vmem:[%s197 + $0x8] sm:$0xf]
          %v412 = vcombine.high %v408, %v408
          %413 = vrot.lane.b32.xlu0 %v408, 126
          %v414 = vpop.permute.xlu0 %413
          %415 = vrot.lane.b32.xlu0 %v412, 126
          %v416 = vpop.permute.xlu0 %415
          %417 = vrot.lane.b32.xlu0 %v409, 126
          %v418 = vpop.permute.xlu0 %417
          %vm419 = vcmask 1031168
          %v420 = vsel %vm419, %v414, %v416
          %v421 = vsel %vm419, %v416, %v418
          %v423 = vsel %vm248, %v407, 0
          %v425 = vsel %vm252, %v420, 0
          %v427 = vsel %vm252, %v421, 0
          %429 = vmatprep.subr.mxu0 0.0
          %430 = vmatpush1.msra.mxu0 0.0
          %431 = vmatprep.subr.mxu0 0.0
          %432 = vmatpush1.msra.mxu0 0.0
          %433 = vmatprep.subr.mxu0 0.0
          %434 = vmatpush1.msra.mxu0 0.0
          %435 = vmatprep.subr.mxu0 0.0
          %436 = vmatpush1.msra.mxu0 0.0
          %437 = vmatprep.subr.mxu0 0.0
          %438 = vmatpush1.msra.mxu0 0.0
          %439 = vmatprep.subr.mxu0 0.0
          %440 = vmatpush1.msra.mxu0 0.0
          %441 = vmatprep.subr.mxu0 0.0
          %442 = vmatpush1.msra.mxu0 0.0
          %443 = vmatprep.subr.mxu0 0.0
          %444 = vmatpush1.msra.mxu0 0.0
          %445 = vmatprep.subr.mxu0 0.0
          %446 = vmatpush1.msra.mxu0 0.0
          %447 = vmatprep.subr.mxu0 0.0
          %448 = vmatpush1.msra.mxu0 0.0
          %449 = vmatprep.subr.mxu0 0.0
          %450 = vmatpush1.msra.mxu0 0.0
          %451 = vmatprep.subr.mxu0 0.0
          %452 = vmatpush1.msra.mxu0 0.0
          %453 = vmatprep.subr.mxu0 0.0
          %454 = vmatpush1.msra.mxu0 0.0
          %455 = vmatprep.subr.mxu0 0.0
          %456 = vmatpush1.msra.mxu0 0.0
          %457 = vmatprep.subr.mxu0 0.0
          %458 = vmatpush1.msra.mxu0 0.0
          %459 = vmatprep.subr.mxu0 %v427
          %460 = vmatpush1.msra.mxu0 %v425
          %461 = vmatprep.subr.mxu0 0.0
          %462 = vmatpush2.msra.mxu0 0.0
          %463 = vmatprep.subr.mxu0 0.0
          %464 = vmatpush2.msra.mxu0 0.0
          %465 = vmatprep.subr.mxu0 0.0
          %466 = vmatpush2.msra.mxu0 0.0
          %467 = vmatprep.subr.mxu0 0.0
          %468 = vmatpush2.msra.mxu0 0.0
          %469 = vmatprep.subr.mxu0 0.0
          %470 = vmatpush2.msra.mxu0 0.0
          %471 = vmatprep.subr.mxu0 0.0
          %472 = vmatpush2.msra.mxu0 0.0
          %473 = vmatprep.subr.mxu0 0.0
          %474 = vmatpush2.msra.mxu0 0.0
          %475 = vmatprep.subr.mxu0 0.0
          %476 = vmatpush2.msra.mxu0 0.0
          %477 = vmatprep.subr.mxu0 0.0
          %478 = vmatpush2.msra.mxu0 0.0
          %479 = vmatprep.subr.mxu0 0.0
          %480 = vmatpush2.msra.mxu0 0.0
          %481 = vmatprep.subr.mxu0 0.0
          %482 = vmatpush2.msra.mxu0 0.0
          %483 = vmatprep.subr.mxu0 0.0
          %484 = vmatpush2.msra.mxu0 0.0
          %485 = vmatprep.subr.mxu0 0.0
          %486 = vmatpush2.msra.mxu0 0.0
          %487 = vmatprep.subr.mxu0 0.0
          %488 = vmatpush2.msra.mxu0 0.0
          %489 = vmatprep.subr.mxu0 0.0
          %490 = vmatpush2.msra.mxu0 0.0
          %491 = vmatprep.subr.mxu0 0.0
          %492 = vmatpush2.msra.mxu0 0.0
          %493 = vmatprep.mubr.f32.mxu0 0.0
          %494 = vmatmul.mubr.f32.gmra.mxu0 %v423
          %v495 = vpop.f32.mrf.mxu0
          %v496 = vadd.f32 0.0, %v495
          %v497 = vpop.f32.mrf.mxu0
          %v498 = vadd.f32 0.0, %v497
          %499 = vdwg.mxu0
          %v500 = vadd.f32 %v402, %v496
          %v501 = vadd.f32 %v404, %v498
          %s502 = scalar_lea.vmem %s1, 12
          %v503 = vld [vmem:[%s502] sm:$0xf]
          %v504 = vld [vmem:[%s197] sm:$0xff]
          %v505 = vld [vmem:[%s197 + $0x8] sm:$0xf]
          %v508 = vcombine.high %v504, %v504
          %509 = vrot.lane.b32.xlu0 %v504, 118
          %v510 = vpop.permute.xlu0 %509
          %511 = vrot.lane.b32.xlu0 %v508, 118
          %v512 = vpop.permute.xlu0 %511
          %513 = vrot.lane.b32.xlu0 %v505, 118
          %v514 = vpop.permute.xlu0 %513
          %vm515 = vcmask 965632
          %v516 = vsel %vm515, %v510, %v512
          %v517 = vsel %vm515, %v512, %v514
          %v519 = vsel %vm248, %v503, 0
          %v521 = vsel %vm252, %v516, 0
          %v523 = vsel %vm252, %v517, 0
          %525 = vmatprep.subr.mxu0 0.0
          %526 = vmatpush1.msra.mxu0 0.0
          %527 = vmatprep.subr.mxu0 0.0
          %528 = vmatpush1.msra.mxu0 0.0
          %529 = vmatprep.subr.mxu0 0.0
          %530 = vmatpush1.msra.mxu0 0.0
          %531 = vmatprep.subr.mxu0 0.0
          %532 = vmatpush1.msra.mxu0 0.0
          %533 = vmatprep.subr.mxu0 0.0
          %534 = vmatpush1.msra.mxu0 0.0
          %535 = vmatprep.subr.mxu0 0.0
          %536 = vmatpush1.msra.mxu0 0.0
          %537 = vmatprep.subr.mxu0 0.0
          %538 = vmatpush1.msra.mxu0 0.0
          %539 = vmatprep.subr.mxu0 0.0
          %540 = vmatpush1.msra.mxu0 0.0
          %541 = vmatprep.subr.mxu0 0.0
          %542 = vmatpush1.msra.mxu0 0.0
          %543 = vmatprep.subr.mxu0 0.0
          %544 = vmatpush1.msra.mxu0 0.0
          %545 = vmatprep.subr.mxu0 0.0
          %546 = vmatpush1.msra.mxu0 0.0
          %547 = vmatprep.subr.mxu0 0.0
          %548 = vmatpush1.msra.mxu0 0.0
          %549 = vmatprep.subr.mxu0 0.0
          %550 = vmatpush1.msra.mxu0 0.0
          %551 = vmatprep.subr.mxu0 0.0
          %552 = vmatpush1.msra.mxu0 0.0
          %553 = vmatprep.subr.mxu0 0.0
          %554 = vmatpush1.msra.mxu0 0.0
          %555 = vmatprep.subr.mxu0 %v523
          %556 = vmatpush1.msra.mxu0 %v521
          %557 = vmatprep.subr.mxu0 0.0
          %558 = vmatpush2.msra.mxu0 0.0
          %559 = vmatprep.subr.mxu0 0.0
          %560 = vmatpush2.msra.mxu0 0.0
          %561 = vmatprep.subr.mxu0 0.0
          %562 = vmatpush2.msra.mxu0 0.0
          %563 = vmatprep.subr.mxu0 0.0
          %564 = vmatpush2.msra.mxu0 0.0
          %565 = vmatprep.subr.mxu0 0.0
          %566 = vmatpush2.msra.mxu0 0.0
          %567 = vmatprep.subr.mxu0 0.0
          %568 = vmatpush2.msra.mxu0 0.0
          %569 = vmatprep.subr.mxu0 0.0
          %570 = vmatpush2.msra.mxu0 0.0
          %571 = vmatprep.subr.mxu0 0.0
          %572 = vmatpush2.msra.mxu0 0.0
          %573 = vmatprep.subr.mxu0 0.0
          %574 = vmatpush2.msra.mxu0 0.0
          %575 = vmatprep.subr.mxu0 0.0
          %576 = vmatpush2.msra.mxu0 0.0
          %577 = vmatprep.subr.mxu0 0.0
          %578 = vmatpush2.msra.mxu0 0.0
          %579 = vmatprep.subr.mxu0 0.0
          %580 = vmatpush2.msra.mxu0 0.0
          %581 = vmatprep.subr.mxu0 0.0
          %582 = vmatpush2.msra.mxu0 0.0
          %583 = vmatprep.subr.mxu0 0.0
          %584 = vmatpush2.msra.mxu0 0.0
          %585 = vmatprep.subr.mxu0 0.0
          %586 = vmatpush2.msra.mxu0 0.0
          %587 = vmatprep.subr.mxu0 0.0
          %588 = vmatpush2.msra.mxu0 0.0
          %589 = vmatprep.mubr.f32.mxu0 0.0
          %590 = vmatmul.mubr.f32.gmra.mxu0 %v519
          %v591 = vpop.f32.mrf.mxu0
          %v592 = vadd.f32 0.0, %v591
          %v593 = vpop.f32.mrf.mxu0
          %v594 = vadd.f32 0.0, %v593
          %595 = vdwg.mxu0
          %v596 = vadd.f32 %v500, %v592
          %v597 = vadd.f32 %v501, %v594
          %s598 = scalar_lea.vmem %s1, 16
          %v599 = vld [vmem:[%s598] sm:$0xf]
          %v600 = vld [vmem:[%s197] sm:$0xff]
          %v601 = vld [vmem:[%s197 + $0x8] sm:$0xf]
          %v604 = vcombine.high %v600, %v600
          %605 = vrot.lane.b32.xlu0 %v600, 117
          %v606 = vpop.permute.xlu0 %605
          %607 = vrot.lane.b32.xlu0 %v604, 117
          %v608 = vpop.permute.xlu0 %607
          %609 = vrot.lane.b32.xlu0 %v601, 117
          %v610 = vpop.permute.xlu0 %609
          %vm611 = vcmask 957440
          %v612 = vsel %vm611, %v606, %v608
          %v613 = vsel %vm611, %v608, %v610
          %v615 = vsel %vm248, %v599, 0
          %v617 = vsel %vm252, %v612, 0
          %v619 = vsel %vm252, %v613, 0
          %621 = vmatprep.subr.mxu0 0.0
          %622 = vmatpush1.msra.mxu0 0.0
          %623 = vmatprep.subr.mxu0 0.0
          %624 = vmatpush1.msra.mxu0 0.0
          %625 = vmatprep.subr.mxu0 0.0
          %626 = vmatpush1.msra.mxu0 0.0
          %627 = vmatprep.subr.mxu0 0.0
          %628 = vmatpush1.msra.mxu0 0.0
          %629 = vmatprep.subr.mxu0 0.0
          %630 = vmatpush1.msra.mxu0 0.0
          %631 = vmatprep.subr.mxu0 0.0
          %632 = vmatpush1.msra.mxu0 0.0
          %633 = vmatprep.subr.mxu0 0.0
          %634 = vmatpush1.msra.mxu0 0.0
          %635 = vmatprep.subr.mxu0 0.0
          %636 = vmatpush1.msra.mxu0 0.0
          %637 = vmatprep.subr.mxu0 0.0
          %638 = vmatpush1.msra.mxu0 0.0
          %639 = vmatprep.subr.mxu0 0.0
          %640 = vmatpush1.msra.mxu0 0.0
          %641 = vmatprep.subr.mxu0 0.0
          %642 = vmatpush1.msra.mxu0 0.0
          %643 = vmatprep.subr.mxu0 0.0
          %644 = vmatpush1.msra.mxu0 0.0
          %645 = vmatprep.subr.mxu0 0.0
          %646 = vmatpush1.msra.mxu0 0.0
          %647 = vmatprep.subr.mxu0 0.0
          %648 = vmatpush1.msra.mxu0 0.0
          %649 = vmatprep.subr.mxu0 0.0
          %650 = vmatpush1.msra.mxu0 0.0
          %651 = vmatprep.subr.mxu0 %v619
          %652 = vmatpush1.msra.mxu0 %v617
          %653 = vmatprep.subr.mxu0 0.0
          %654 = vmatpush2.msra.mxu0 0.0
          %655 = vmatprep.subr.mxu0 0.0
          %656 = vmatpush2.msra.mxu0 0.0
          %657 = vmatprep.subr.mxu0 0.0
          %658 = vmatpush2.msra.mxu0 0.0
          %659 = vmatprep.subr.mxu0 0.0
          %660 = vmatpush2.msra.mxu0 0.0
          %661 = vmatprep.subr.mxu0 0.0
          %662 = vmatpush2.msra.mxu0 0.0
          %663 = vmatprep.subr.mxu0 0.0
          %664 = vmatpush2.msra.mxu0 0.0
          %665 = vmatprep.subr.mxu0 0.0
          %666 = vmatpush2.msra.mxu0 0.0
          %667 = vmatprep.subr.mxu0 0.0
          %668 = vmatpush2.msra.mxu0 0.0
          %669 = vmatprep.subr.mxu0 0.0
          %670 = vmatpush2.msra.mxu0 0.0
          %671 = vmatprep.subr.mxu0 0.0
          %672 = vmatpush2.msra.mxu0 0.0
          %673 = vmatprep.subr.mxu0 0.0
          %674 = vmatpush2.msra.mxu0 0.0
          %675 = vmatprep.subr.mxu0 0.0
          %676 = vmatpush2.msra.mxu0 0.0
          %677 = vmatprep.subr.mxu0 0.0
          %678 = vmatpush2.msra.mxu0 0.0
          %679 = vmatprep.subr.mxu0 0.0
          %680 = vmatpush2.msra.mxu0 0.0
          %681 = vmatprep.subr.mxu0 0.0
          %682 = vmatpush2.msra.mxu0 0.0
          %683 = vmatprep.subr.mxu0 0.0
          %684 = vmatpush2.msra.mxu0 0.0
          %685 = vmatprep.mubr.f32.mxu0 0.0
          %686 = vmatmul.mubr.f32.gmra.mxu0 %v615
          %v687 = vpop.f32.mrf.mxu0
          %v688 = vadd.f32 0.0, %v687
          %v689 = vpop.f32.mrf.mxu0
          %v690 = vadd.f32 0.0, %v689
          %691 = vdwg.mxu0
          %v692 = vadd.f32 %v596, %v688
          %v693 = vadd.f32 %v597, %v690
          %s694 = scalar_lea.vmem %s1, 20
          %v695 = vld [vmem:[%s694] sm:$0xf]
          %v696 = vld [vmem:[%s197] sm:$0xff]
          %v697 = vld [vmem:[%s197 + $0x8] sm:$0xf]
          %v700 = vcombine.high %v696, %v696
          %701 = vrot.lane.b32.xlu0 %v696, 116
          %v702 = vpop.permute.xlu0 %701
          %703 = vrot.lane.b32.xlu0 %v700, 116
          %v704 = vpop.permute.xlu0 %703
          %705 = vrot.lane.b32.xlu0 %v697, 116
          %v706 = vpop.permute.xlu0 %705
          %vm707 = vcmask 949248
          %v708 = vsel %vm707, %v702, %v704
          %v709 = vsel %vm707, %v704, %v706
          %v711 = vsel %vm248, %v695, 0
          %v713 = vsel %vm252, %v708, 0
          %v715 = vsel %vm252, %v709, 0
          %717 = vmatprep.subr.mxu0 0.0
          %718 = vmatpush1.msra.mxu0 0.0
          %719 = vmatprep.subr.mxu0 0.0
          %720 = vmatpush1.msra.mxu0 0.0
          %721 = vmatprep.subr.mxu0 0.0
          %722 = vmatpush1.msra.mxu0 0.0
          %723 = vmatprep.subr.mxu0 0.0
          %724 = vmatpush1.msra.mxu0 0.0
          %725 = vmatprep.subr.mxu0 0.0
          %726 = vmatpush1.msra.mxu0 0.0
          %727 = vmatprep.subr.mxu0 0.0
          %728 = vmatpush1.msra.mxu0 0.0
          %729 = vmatprep.subr.mxu0 0.0
          %730 = vmatpush1.msra.mxu0 0.0
          %731 = vmatprep.subr.mxu0 0.0
          %732 = vmatpush1.msra.mxu0 0.0
          %733 = vmatprep.subr.mxu0 0.0
          %734 = vmatpush1.msra.mxu0 0.0
          %735 = vmatprep.subr.mxu0 0.0
          %736 = vmatpush1.msra.mxu0 0.0
          %737 = vmatprep.subr.mxu0 0.0
          %738 = vmatpush1.msra.mxu0 0.0
          %739 = vmatprep.subr.mxu0 0.0
          %740 = vmatpush1.msra.mxu0 0.0
          %741 = vmatprep.subr.mxu0 0.0
          %742 = vmatpush1.msra.mxu0 0.0
          %743 = vmatprep.subr.mxu0 0.0
          %744 = vmatpush1.msra.mxu0 0.0
          %745 = vmatprep.subr.mxu0 0.0
          %746 = vmatpush1.msra.mxu0 0.0
          %747 = vmatprep.subr.mxu0 %v715
          %748 = vmatpush1.msra.mxu0 %v713
          %749 = vmatprep.subr.mxu0 0.0
          %750 = vmatpush2.msra.mxu0 0.0
          %751 = vmatprep.subr.mxu0 0.0
          %752 = vmatpush2.msra.mxu0 0.0
          %753 = vmatprep.subr.mxu0 0.0
          %754 = vmatpush2.msra.mxu0 0.0
          %755 = vmatprep.subr.mxu0 0.0
          %756 = vmatpush2.msra.mxu0 0.0
          %757 = vmatprep.subr.mxu0 0.0
          %758 = vmatpush2.msra.mxu0 0.0
          %759 = vmatprep.subr.mxu0 0.0
          %760 = vmatpush2.msra.mxu0 0.0
          %761 = vmatprep.subr.mxu0 0.0
          %762 = vmatpush2.msra.mxu0 0.0
          %763 = vmatprep.subr.mxu0 0.0
          %764 = vmatpush2.msra.mxu0 0.0
          %765 = vmatprep.subr.mxu0 0.0
          %766 = vmatpush2.msra.mxu0 0.0
          %767 = vmatprep.subr.mxu0 0.0
          %768 = vmatpush2.msra.mxu0 0.0
          %769 = vmatprep.subr.mxu0 0.0
          %770 = vmatpush2.msra.mxu0 0.0
          %771 = vmatprep.subr.mxu0 0.0
          %772 = vmatpush2.msra.mxu0 0.0
          %773 = vmatprep.subr.mxu0 0.0
          %774 = vmatpush2.msra.mxu0 0.0
          %775 = vmatprep.subr.mxu0 0.0
          %776 = vmatpush2.msra.mxu0 0.0
          %777 = vmatprep.subr.mxu0 0.0
          %778 = vmatpush2.msra.mxu0 0.0
          %779 = vmatprep.subr.mxu0 0.0
          %780 = vmatpush2.msra.mxu0 0.0
          %781 = vmatprep.mubr.f32.mxu0 0.0
          %782 = vmatmul.mubr.f32.gmra.mxu0 %v711
          %v783 = vpop.f32.mrf.mxu0
          %v784 = vadd.f32 0.0, %v783
          %v785 = vpop.f32.mrf.mxu0
          %v786 = vadd.f32 0.0, %v785
          %787 = vdwg.mxu0
          %v788 = vadd.f32 %v692, %v784
          %v789 = vadd.f32 %v693, %v786
          %s790 = scalar_lea.vmem %s1, 24
          %v791 = vld [vmem:[%s790] sm:$0xf]
          %v792 = vld [vmem:[%s197] sm:$0xff]
          %v793 = vld [vmem:[%s197 + $0x8] sm:$0xf]
          %v796 = vcombine.high %v792, %v792
          %797 = vrot.lane.b32.xlu0 %v792, 108
          %v798 = vpop.permute.xlu0 %797
          %799 = vrot.lane.b32.xlu0 %v796, 108
          %v800 = vpop.permute.xlu0 %799
          %801 = vrot.lane.b32.xlu0 %v793, 108
          %v802 = vpop.permute.xlu0 %801
          %vm803 = vcmask 883712
          %v804 = vsel %vm803, %v798, %v800
          %v805 = vsel %vm803, %v800, %v802
          %v807 = vsel %vm248, %v791, 0
          %v809 = vsel %vm252, %v804, 0
          %v811 = vsel %vm252, %v805, 0
          %813 = vmatprep.subr.mxu0 0.0
          %814 = vmatpush1.msra.mxu0 0.0
          %815 = vmatprep.subr.mxu0 0.0
          %816 = vmatpush1.msra.mxu0 0.0
          %817 = vmatprep.subr.mxu0 0.0
          %818 = vmatpush1.msra.mxu0 0.0
          %819 = vmatprep.subr.mxu0 0.0
          %820 = vmatpush1.msra.mxu0 0.0
          %821 = vmatprep.subr.mxu0 0.0
          %822 = vmatpush1.msra.mxu0 0.0
          %823 = vmatprep.subr.mxu0 0.0
          %824 = vmatpush1.msra.mxu0 0.0
          %825 = vmatprep.subr.mxu0 0.0
          %826 = vmatpush1.msra.mxu0 0.0
          %827 = vmatprep.subr.mxu0 0.0
          %828 = vmatpush1.msra.mxu0 0.0
          %829 = vmatprep.subr.mxu0 0.0
          %830 = vmatpush1.msra.mxu0 0.0
          %831 = vmatprep.subr.mxu0 0.0
          %832 = vmatpush1.msra.mxu0 0.0
          %833 = vmatprep.subr.mxu0 0.0
          %834 = vmatpush1.msra.mxu0 0.0
          %835 = vmatprep.subr.mxu0 0.0
          %836 = vmatpush1.msra.mxu0 0.0
          %837 = vmatprep.subr.mxu0 0.0
          %838 = vmatpush1.msra.mxu0 0.0
          %839 = vmatprep.subr.mxu0 0.0
          %840 = vmatpush1.msra.mxu0 0.0
          %841 = vmatprep.subr.mxu0 0.0
          %842 = vmatpush1.msra.mxu0 0.0
          %843 = vmatprep.subr.mxu0 %v811
          %844 = vmatpush1.msra.mxu0 %v809
          %845 = vmatprep.subr.mxu0 0.0
          %846 = vmatpush2.msra.mxu0 0.0
          %847 = vmatprep.subr.mxu0 0.0
          %848 = vmatpush2.msra.mxu0 0.0
          %849 = vmatprep.subr.mxu0 0.0
          %850 = vmatpush2.msra.mxu0 0.0
          %851 = vmatprep.subr.mxu0 0.0
          %852 = vmatpush2.msra.mxu0 0.0
          %853 = vmatprep.subr.mxu0 0.0
          %854 = vmatpush2.msra.mxu0 0.0
          %855 = vmatprep.subr.mxu0 0.0
          %856 = vmatpush2.msra.mxu0 0.0
          %857 = vmatprep.subr.mxu0 0.0
          %858 = vmatpush2.msra.mxu0 0.0
          %859 = vmatprep.subr.mxu0 0.0
          %860 = vmatpush2.msra.mxu0 0.0
          %861 = vmatprep.subr.mxu0 0.0
          %862 = vmatpush2.msra.mxu0 0.0
          %863 = vmatprep.subr.mxu0 0.0
          %864 = vmatpush2.msra.mxu0 0.0
          %865 = vmatprep.subr.mxu0 0.0
          %866 = vmatpush2.msra.mxu0 0.0
          %867 = vmatprep.subr.mxu0 0.0
          %868 = vmatpush2.msra.mxu0 0.0
          %869 = vmatprep.subr.mxu0 0.0
          %870 = vmatpush2.msra.mxu0 0.0
          %871 = vmatprep.subr.mxu0 0.0
          %872 = vmatpush2.msra.mxu0 0.0
          %873 = vmatprep.subr.mxu0 0.0
          %874 = vmatpush2.msra.mxu0 0.0
          %875 = vmatprep.subr.mxu0 0.0
          %876 = vmatpush2.msra.mxu0 0.0
          %877 = vmatprep.mubr.f32.mxu0 0.0
          %878 = vmatmul.mubr.f32.gmra.mxu0 %v807
          %v879 = vpop.f32.mrf.mxu0
          %v880 = vadd.f32 0.0, %v879
          %v881 = vpop.f32.mrf.mxu0
          %v882 = vadd.f32 0.0, %v881
          %883 = vdwg.mxu0
          %v884 = vadd.f32 %v788, %v880
          %v885 = vadd.f32 %v789, %v882
          %s886 = scalar_lea.vmem %s1, 28
          %v887 = vld [vmem:[%s886] sm:$0xf]
          %v888 = vld [vmem:[%s197] sm:$0xff]
          %v889 = vld [vmem:[%s197 + $0x8] sm:$0xf]
          %v892 = vcombine.high %v888, %v888
          %893 = vrot.lane.b32.xlu0 %v888, 107
          %v894 = vpop.permute.xlu0 %893
          %895 = vrot.lane.b32.xlu0 %v892, 107
          %v896 = vpop.permute.xlu0 %895
          %897 = vrot.lane.b32.xlu0 %v889, 107
          %v898 = vpop.permute.xlu0 %897
          %vm899 = vcmask 875520
          %v900 = vsel %vm899, %v894, %v896
          %v901 = vsel %vm899, %v896, %v898
          %v903 = vsel %vm248, %v887, 0
          %v905 = vsel %vm252, %v900, 0
          %v907 = vsel %vm252, %v901, 0
          %909 = vmatprep.subr.mxu0 0.0
          %910 = vmatpush1.msra.mxu0 0.0
          %911 = vmatprep.subr.mxu0 0.0
          %912 = vmatpush1.msra.mxu0 0.0
          %913 = vmatprep.subr.mxu0 0.0
          %914 = vmatpush1.msra.mxu0 0.0
          %915 = vmatprep.subr.mxu0 0.0
          %916 = vmatpush1.msra.mxu0 0.0
          %917 = vmatprep.subr.mxu0 0.0
          %918 = vmatpush1.msra.mxu0 0.0
          %919 = vmatprep.subr.mxu0 0.0
          %920 = vmatpush1.msra.mxu0 0.0
          %921 = vmatprep.subr.mxu0 0.0
          %922 = vmatpush1.msra.mxu0 0.0
          %923 = vmatprep.subr.mxu0 0.0
          %924 = vmatpush1.msra.mxu0 0.0
          %925 = vmatprep.subr.mxu0 0.0
          %926 = vmatpush1.msra.mxu0 0.0
          %927 = vmatprep.subr.mxu0 0.0
          %928 = vmatpush1.msra.mxu0 0.0
          %929 = vmatprep.subr.mxu0 0.0
          %930 = vmatpush1.msra.mxu0 0.0
          %931 = vmatprep.subr.mxu0 0.0
          %932 = vmatpush1.msra.mxu0 0.0
          %933 = vmatprep.subr.mxu0 0.0
          %934 = vmatpush1.msra.mxu0 0.0
          %935 = vmatprep.subr.mxu0 0.0
          %936 = vmatpush1.msra.mxu0 0.0
          %937 = vmatprep.subr.mxu0 0.0
          %938 = vmatpush1.msra.mxu0 0.0
          %939 = vmatprep.subr.mxu0 %v907
          %940 = vmatpush1.msra.mxu0 %v905
          %941 = vmatprep.subr.mxu0 0.0
          %942 = vmatpush2.msra.mxu0 0.0
          %943 = vmatprep.subr.mxu0 0.0
          %944 = vmatpush2.msra.mxu0 0.0
          %945 = vmatprep.subr.mxu0 0.0
          %946 = vmatpush2.msra.mxu0 0.0
          %947 = vmatprep.subr.mxu0 0.0
          %948 = vmatpush2.msra.mxu0 0.0
          %949 = vmatprep.subr.mxu0 0.0
          %950 = vmatpush2.msra.mxu0 0.0
          %951 = vmatprep.subr.mxu0 0.0
          %952 = vmatpush2.msra.mxu0 0.0
          %953 = vmatprep.subr.mxu0 0.0
          %954 = vmatpush2.msra.mxu0 0.0
          %955 = vmatprep.subr.mxu0 0.0
          %956 = vmatpush2.msra.mxu0 0.0
          %957 = vmatprep.subr.mxu0 0.0
          %958 = vmatpush2.msra.mxu0 0.0
          %959 = vmatprep.subr.mxu0 0.0
          %960 = vmatpush2.msra.mxu0 0.0
          %961 = vmatprep.subr.mxu0 0.0
          %962 = vmatpush2.msra.mxu0 0.0
          %963 = vmatprep.subr.mxu0 0.0
          %964 = vmatpush2.msra.mxu0 0.0
          %965 = vmatprep.subr.mxu0 0.0
          %966 = vmatpush2.msra.mxu0 0.0
          %967 = vmatprep.subr.mxu0 0.0
          %968 = vmatpush2.msra.mxu0 0.0
          %969 = vmatprep.subr.mxu0 0.0
          %970 = vmatpush2.msra.mxu0 0.0
          %971 = vmatprep.subr.mxu0 0.0
          %972 = vmatpush2.msra.mxu0 0.0
          %973 = vmatprep.mubr.f32.mxu0 0.0
          %974 = vmatmul.mubr.f32.gmra.mxu0 %v903
          %v975 = vpop.f32.mrf.mxu0
          %v976 = vadd.f32 0.0, %v975
          %v977 = vpop.f32.mrf.mxu0
          %v978 = vadd.f32 0.0, %v977
          %979 = vdwg.mxu0
          %v980 = vadd.f32 %v884, %v976
          %v981 = vadd.f32 %v885, %v978
          %s982 = scalar_lea.vmem %s1, 32
          %v983 = vld [vmem:[%s982] sm:$0xf]
          %v984 = vld [vmem:[%s197] sm:$0xff]
          %v985 = vld [vmem:[%s197 + $0x8] sm:$0xf]
          %v988 = vcombine.high %v984, %v984
          %989 = vrot.lane.b32.xlu0 %v984, 106
          %v990 = vpop.permute.xlu0 %989
          %991 = vrot.lane.b32.xlu0 %v988, 106
          %v992 = vpop.permute.xlu0 %991
          %993 = vrot.lane.b32.xlu0 %v985, 106
          %v994 = vpop.permute.xlu0 %993
          %vm995 = vcmask 867328
          %v996 = vsel %vm995, %v990, %v992
          %v997 = vsel %vm995, %v992, %v994
          %v999 = vsel %vm248, %v983, 0
          %v1001 = vsel %vm252, %v996, 0
          %v1003 = vsel %vm252, %v997, 0
          %1005 = vmatprep.subr.mxu0 0.0
          %1006 = vmatpush1.msra.mxu0 0.0
          %1007 = vmatprep.subr.mxu0 0.0
          %1008 = vmatpush1.msra.mxu0 0.0
          %1009 = vmatprep.subr.mxu0 0.0
          %1010 = vmatpush1.msra.mxu0 0.0
          %1011 = vmatprep.subr.mxu0 0.0
          %1012 = vmatpush1.msra.mxu0 0.0
          %1013 = vmatprep.subr.mxu0 0.0
          %1014 = vmatpush1.msra.mxu0 0.0
          %1015 = vmatprep.subr.mxu0 0.0
          %1016 = vmatpush1.msra.mxu0 0.0
          %1017 = vmatprep.subr.mxu0 0.0
          %1018 = vmatpush1.msra.mxu0 0.0
          %1019 = vmatprep.subr.mxu0 0.0
          %1020 = vmatpush1.msra.mxu0 0.0
          %1021 = vmatprep.subr.mxu0 0.0
          %1022 = vmatpush1.msra.mxu0 0.0
          %1023 = vmatprep.subr.mxu0 0.0
          %1024 = vmatpush1.msra.mxu0 0.0
          %1025 = vmatprep.subr.mxu0 0.0
          %1026 = vmatpush1.msra.mxu0 0.0
          %1027 = vmatprep.subr.mxu0 0.0
          %1028 = vmatpush1.msra.mxu0 0.0
          %1029 = vmatprep.subr.mxu0 0.0
          %1030 = vmatpush1.msra.mxu0 0.0
          %1031 = vmatprep.subr.mxu0 0.0
          %1032 = vmatpush1.msra.mxu0 0.0
          %1033 = vmatprep.subr.mxu0 0.0
          %1034 = vmatpush1.msra.mxu0 0.0
          %1035 = vmatprep.subr.mxu0 %v1003
          %1036 = vmatpush1.msra.mxu0 %v1001
          %1037 = vmatprep.subr.mxu0 0.0
          %1038 = vmatpush2.msra.mxu0 0.0
          %1039 = vmatprep.subr.mxu0 0.0
          %1040 = vmatpush2.msra.mxu0 0.0
          %1041 = vmatprep.subr.mxu0 0.0
          %1042 = vmatpush2.msra.mxu0 0.0
          %1043 = vmatprep.subr.mxu0 0.0
          %1044 = vmatpush2.msra.mxu0 0.0
          %1045 = vmatprep.subr.mxu0 0.0
          %1046 = vmatpush2.msra.mxu0 0.0
          %1047 = vmatprep.subr.mxu0 0.0
          %1048 = vmatpush2.msra.mxu0 0.0
          %1049 = vmatprep.subr.mxu0 0.0
          %1050 = vmatpush2.msra.mxu0 0.0
          %1051 = vmatprep.subr.mxu0 0.0
          %1052 = vmatpush2.msra.mxu0 0.0
          %1053 = vmatprep.subr.mxu0 0.0
          %1054 = vmatpush2.msra.mxu0 0.0
          %1055 = vmatprep.subr.mxu0 0.0
          %1056 = vmatpush2.msra.mxu0 0.0
          %1057 = vmatprep.subr.mxu0 0.0
          %1058 = vmatpush2.msra.mxu0 0.0
          %1059 = vmatprep.subr.mxu0 0.0
          %1060 = vmatpush2.msra.mxu0 0.0
          %1061 = vmatprep.subr.mxu0 0.0
          %1062 = vmatpush2.msra.mxu0 0.0
          %1063 = vmatprep.subr.mxu0 0.0
          %1064 = vmatpush2.msra.mxu0 0.0
          %1065 = vmatprep.subr.mxu0 0.0
          %1066 = vmatpush2.msra.mxu0 0.0
          %1067 = vmatprep.subr.mxu0 0.0
          %1068 = vmatpush2.msra.mxu0 0.0
          %1069 = vmatprep.mubr.f32.mxu0 0.0
          %1070 = vmatmul.mubr.f32.gmra.mxu0 %v999
          %v1071 = vpop.f32.mrf.mxu0
          %v1072 = vadd.f32 0.0, %v1071
          %v1073 = vpop.f32.mrf.mxu0
          %v1074 = vadd.f32 0.0, %v1073
          %1075 = vdwg.mxu0
          %v1076 = vadd.f32 %v980, %v1072
          %v1077 = vadd.f32 %v981, %v1074
          %v1078 = vld [vmem:[%s2] sm:$0x3]
          %v1080 = vlaneseq
          %v1081 = vshrl.u32 %v1080, 7
          %v1082 = vsub.s32 0, %v1081
          %v1083 = vrot.slane %v1078, %v1082
          %v1084 = vlaneseq
          %v1085 = vshrl.u32 %v1084, 7
          %v1086 = vsub.s32 1, %v1085
          %v1087 = vrot.slane %v1078, %v1086
          %v1090 = vmul.f32 %v1076, %v1083
          %v1091 = vmul.f32 %v1077, %v1087
          %v1094 = vcombine.low %v1090, %v1091
          %1096 = vst [vmem:[%s219] sm:$0xff] %v1094
        $region40: #{tpu_custom_call.1} parent=31 // pred_fallthru
          _
        %p1097 = pneg %p228
        // Predicated region
        $region41: #{tpu_custom_call.1} parent=31 // pred_check
          _
        $region42: #{tpu_custom_call.1} parent=31 // pred_check_branch
          %1099 = sbr.rel (%p228) target = $region44
        $region43: #{tpu_custom_call.1} parent=31 // pred_region
          %1100 = vst [vmem:[%s219] sm:$0xff] 0.0
        $region44: #{tpu_custom_call.1} parent=31 // pred_fallthru
          _
        %s1101 = sand.u32 %s122, 1
        %s1102 = scalar_lea.sflag [#allocation4], %s1101
        %s1103 = sand.u32 %s122, 1
        %s1104 = smul.addr %s1103, 8
        %s1105 = scalar_lea.vmem [#allocation5], %s1104
        // Predicated region
        $region45: #{tpu_custom_call.1} parent=31 // pred_check
          %p1106 = pneg %p132
        $region46: #{tpu_custom_call.1} parent=31 // pred_check_branch
          %1108 = sbr.rel (%p1106) target = $region48
        $region47: #{tpu_custom_call.1} parent=31 // pred_region
          %s1110 = ssub.s32 128, 128
          %1111 = vsyncadd %s1102, %s1110
          %s1112 = smul.addr %s25, 2
          %s1113 = smul.addr %s24, 12
          %s1114 = sadd.s32 %s1112, %s1113
          %s1115 = smul.addr %s1114, 64
          %s1116 = scalar_lea.hbm %s3, %s1115
          %s1118 = sshll.u32 %s1105, 4
          %s1119 = int_to_ptr.vmem [resolvable:$true] %s1118
          %1121 = dma.vmem_to_hbm [thread:$0]  %s1119, 128, %s1116, %s1102
        $region48: #{tpu_custom_call.1} parent=31 // pred_fallthru
          _
      $region32: #{tpu_custom_call.1} parent=5 // pred_fallthru
        _
      %p1122 = scmp.le.s32.totalorder 2, %s15
      // Predicated region
      $region49: #{tpu_custom_call.1} parent=5 // pred_check
        %p1123 = pneg %p1122
      $region50: #{tpu_custom_call.1} parent=5 // pred_check_branch
        %1125 = sbr.rel (%p1123) target = $region52
      $region51: #{tpu_custom_call.1} parent=5 // pred_region
        %s1126 = ssub.s32 %s15, 2
        // Predicated region
        $region53: #{tpu_custom_call.1} parent=51 // pred_check
          %p1127 = pneg %p138
        $region54: #{tpu_custom_call.1} parent=51 // pred_check_branch
          %1129 = sbr.rel (%p1127) target = $region56
        $region55: #{tpu_custom_call.1} parent=51 // pred_region
          %s1130 = sand.u32 %s123, 1
          %s1131 = scalar_lea.sflag [#allocation4], %s1130
          %s1132 = sand.u32 %s123, 1
          %s1133 = smul.addr %s1132, 8
          %s1134 = scalar_lea.vmem [#allocation5], %s1133
          %1135 = dma.done %s1131, 128
        $region56: #{tpu_custom_call.1} parent=51 // pred_fallthru
          _
      $region52: #{tpu_custom_call.1} parent=5 // pred_fallthru
        _
    $region6: #{tpu_custom_call.1} parent=1 // loop_footer
      %s19 = sadd.s32 1, %s15
    $region7: #{tpu_custom_call.1} parent=1 // loop_footer_branch
      %14 = sbr.rel target = $region3
    $region8: #{tpu_custom_call.1} parent=1 // loop_exit
      _
    %1136 = vsyncpa [#allocation3], 1
    %s1137 = scalar_lea.sflag [#allocation3], 1
    %1138 = vsyncpa %s1137, 1
    %1139 = vsyncpa [#allocation4], 1
    %s1140 = scalar_lea.sflag [#allocation4], 1
    %1141 = vsyncpa %s1140, 1

</llo_original>
